<compile_context>
chip_gen: v7x
topology: tpu7x:2x2x1
jax: 0.10.0
libtpu: 0.0.40
codegen_flags: <defaults>
</compile_context>

<pallas_src>
import functools

import jax
import jax.numpy as jnp
from jax.experimental import pallas as pl
from jax.experimental.pallas import tpu as pltpu


def _round_up(x, m):
    return (x + m - 1) // m * m


def _ffn_kernel(x_ref, w1_ref, b1_ref, w2_ref, b2_ref, o_ref, acc_ref):
    # x_ref:  (tm, d_model_p)   compute dtype (bf16)
    # w1_ref: (d_model_p, tk)   compute dtype
    # b1_ref: (1, tk)           f32
    # w2_ref: (tk, d_model_p)   compute dtype
    # b2_ref: (1, d_model_p)    f32
    # o_ref:  (tm, d_model_p)   output dtype
    # acc_ref:(tm, d_model_p)   f32 VMEM scratch (persists across k)
    k = pl.program_id(1)

    @pl.when(k == 0)
    def _init():
        # Fold b2 into the accumulator init (saves a full VPU add at finalize).
        acc_ref[...] = jnp.broadcast_to(b2_ref[...], acc_ref.shape)

    # First GEMM slab: (tm, d_model) @ (d_model, tk) -> f32
    h = jnp.dot(x_ref[...], w1_ref[...], preferred_element_type=jnp.float32)
    h = jnp.maximum(h + b1_ref[...], 0.0)      # bias + ReLU in f32
    # Dropout: identity (eval mode).
    # Second GEMM slab accumulates into the f32 scratch.
    acc_ref[...] += jnp.dot(h.astype(w2_ref.dtype), w2_ref[...],
                            preferred_element_type=jnp.float32)

    @pl.when(k == pl.num_programs(1) - 1)
    def _finalize():
        o_ref[...] = acc_ref[...].astype(o_ref.dtype)


@functools.partial(jax.jit, static_argnames=("compute_dtype",))
def feed_forward_block(x, w1, b1, w2, b2, *, compute_dtype=jnp.bfloat16):
    """Fused FFN: relu(x @ w1 + b1) @ w2 + b2   (dropout = identity / eval).

    x : [batch, seq, d_model]
    w1: [d_model, d_ff]   (transposed from PyTorch's [d_ff, d_model])
    b1: [d_ff]
    w2: [d_ff, d_model]
    b2: [d_model]
    """
    batch, seq, d_model = x.shape
    d_ff = w1.shape[1]
    M = batch * seq
    out_dtype = x.dtype

    # ---- padded / lane-dense problem sizes -------------------------------
    d_model_p = _round_up(d_model, 128)
    d_ff_p = _round_up(d_ff, 128)

    # Hidden-dim tile: largest of {512, 256, 128} that divides padded d_ff.
    if d_ff_p % 512 == 0:
        tk = 512
    elif d_ff_p % 256 == 0:
        tk = 256
    else:
        tk = 128

    # Row tile: 256 fills the 256x256 MXU (v6e/v7x); small M uses one tile.
    M_p = _round_up(M, 8)
    if M_p > 256:
        tm = 256
        M_p = _round_up(M, 256)
    else:
        tm = M_p

    # ---- pad + cast operands (zero padding is exact for this FFN) --------
    cdt = compute_dtype
    x2d = x.reshape(M, d_model)
    x2d_p = jnp.zeros((M_p, d_model_p), cdt).at[:M, :d_model].set(
        x2d.astype(cdt))
    w1_p = jnp.zeros((d_model_p, d_ff_p), cdt).at[:d_model, :d_ff].set(
        w1.astype(cdt))
    w2_p = jnp.zeros((d_ff_p, d_model_p), cdt).at[:d_ff, :d_model].set(
        w2.astype(cdt))
    b1_p = jnp.zeros((1, d_ff_p), jnp.float32).at[0, :d_ff].set(
        b1.astype(jnp.float32))
    b2_p = jnp.zeros((1, d_model_p), jnp.float32).at[0, :d_model].set(
        b2.astype(jnp.float32))

    grid = (M_p // tm, d_ff_p // tk)

    # ---- VMEM budget / cost hints ----------------------------------------
    cb = jnp.dtype(cdt).itemsize
    ob = jnp.dtype(out_dtype).itemsize
    est_vmem = (2 * tm * d_model_p * cb          # x tile (double-buffered)
                + 2 * d_model_p * tk * cb        # W1 slab
                + 2 * tk * d_model_p * cb        # W2 slab
                + 2 * tk * 4 + 2 * d_model_p * 4 # biases
                + 2 * tm * d_model_p * ob        # output tile
                + tm * d_model_p * 4)            # f32 accumulator scratch
    vmem_limit = min(max(int(est_vmem * 1.5) + (4 << 20), 16 << 20), 48 << 20)

    cost = pl.CostEstimate(
        flops=2 * 2 * M * d_model * d_ff,        # two GEMMs
        transcendentals=0,
        bytes_accessed=(x2d_p.size * cb + w1_p.size * cb + w2_p.size * cb
                        + b1_p.size * 4 + b2_p.size * 4 + M_p * d_model_p * ob),
    )

    out2d_p = pl.pallas_call(
        _ffn_kernel,
        out_shape=jax.ShapeDtypeStruct((M_p, d_model_p), out_dtype),
        grid_spec=pltpu.PrefetchScalarGridSpec(
            num_scalar_prefetch=0,
            grid=grid,
            in_specs=[
                pl.BlockSpec((tm, d_model_p), lambda i, k: (i, 0)),   # x
                pl.BlockSpec((d_model_p, tk), lambda i, k: (0, k)),   # W1 slab
                pl.BlockSpec((1, tk), lambda i, k: (0, k)),           # b1 slab
                pl.BlockSpec((tk, d_model_p), lambda i, k: (k, 0)),   # W2 slab
                pl.BlockSpec((1, d_model_p), lambda i, k: (0, 0)),    # b2
            ],
            out_specs=pl.BlockSpec((tm, d_model_p), lambda i, k: (i, 0)),
            scratch_shapes=[pltpu.VMEM((tm, d_model_p), jnp.float32)],
        ),
        compiler_params=pltpu.CompilerParams(
            dimension_semantics=("parallel", "arbitrary"),
            vmem_limit_bytes=vmem_limit,
        ),
        cost_estimate=cost,
    )(x2d_p, w1_p, b1_p, w2_p, b2_p)

    return out2d_p[:M, :d_model].reshape(batch, seq, d_model)


def init_params(key, d_model, d_ff, dtype=jnp.float32):
    """Deterministic init mimicking nn.Linear's uniform(-1/sqrt(in), 1/sqrt(in))."""
    k1, k2, k3, k4 = jax.random.split(key, 4)
    lim1 = 1.0 / (d_model ** 0.5)
    lim2 = 1.0 / (d_ff ** 0.5)
    # PyTorch stores weight as (out, in); we keep the (in, out) transpose.
    w1 = jax.random.uniform(k1, (d_model, d_ff), dtype, -lim1, lim1)
    b1 = jax.random.uniform(k2, (d_ff,), dtype, -lim1, lim1)
    w2 = jax.random.uniform(k3, (d_ff, d_model), dtype, -lim2, lim2)
    b2 = jax.random.uniform(k4, (d_model,), dtype, -lim2, lim2)
    return w1, b1, w2, b2


if __name__ == "__main__":
    batch, seq, d_model, d_ff = 2, 8, 32, 64
    key = jax.random.PRNGKey(0)
    kx, kp = jax.random.split(key)

    x = jax.random.normal(kx, (batch, seq, d_model), jnp.float32)
    w1, b1, w2, b2 = init_params(kp, d_model, d_ff)

    out = feed_forward_block(x, w1, b1, w2, b2)
    out = jax.block_until_ready(out)
    assert out.shape == (batch, seq, d_model)

    # Reference that mimics the kernel's mixed precision (bf16 GEMMs, f32 acc).
    bf16 = jnp.bfloat16
    h_ref = jnp.maximum(
        jnp.dot(x.astype(bf16).reshape(-1, d_model), w1.astype(bf16),
                preferred_element_type=jnp.float32) + b1, 0.0)
    ref_bf16 = (jnp.dot(h_ref.astype(bf16), w2.astype(bf16),
                        preferred_element_type=jnp.float32)
                + b2).reshape(batch, seq, d_model)
    assert jnp.allclose(out, ref_bf16, atol=2e-2, rtol=2e-2), \
        "mismatch vs mixed-precision reference"

    # Loose sanity check against the pure-f32 math.
    ref_f32 = jnp.maximum(x @ w1 + b1, 0.0) @ w2 + b2
    assert jnp.allclose(out, ref_f32, atol=1e-1, rtol=1e-1), \
        "mismatch vs f32 reference"

    print("KERNEL_OK")
</pallas_src>

<mosaic_0001>
module attributes {stable_mosaic.version = 11 : i64} {
  func.func @_ffn_kernel(%arg0: i32, %arg1: i32, %arg2: memref<16x128xbf16, #tpu.memory_space<vmem>>, %arg3: memref<128x128xbf16, #tpu.memory_space<vmem>>, %arg4: memref<1x128xf32, #tpu.memory_space<vmem>>, %arg5: memref<128x128xbf16, #tpu.memory_space<vmem>>, %arg6: memref<1x128xf32, #tpu.memory_space<vmem>>, %arg7: memref<16x128xf32, #tpu.memory_space<vmem>>, %arg8: memref<16x128xf32, #tpu.memory_space<vmem>>) attributes {dimension_semantics = [#tpu.dimension_semantics<parallel>, #tpu.dimension_semantics<arbitrary>], iteration_bounds = array<i64: 1, 1>, scalar_prefetch = 0 : i64, scratch_operands = 1 : i64, tpu.core_type = #tpu.core_type<tc>, window_params = [{transform_indices = @transform_0, window_bounds = array<i64: 16, 128>}, {transform_indices = @transform_1, window_bounds = array<i64: 128, 128>}, {transform_indices = @transform_2, window_bounds = array<i64: 1, 128>}, {transform_indices = @transform_3, window_bounds = array<i64: 128, 128>}, {pipeline_mode = #tpu.pipeline_mode<synchronous>, transform_indices = @transform_4, window_bounds = array<i64: 1, 128>}, {transform_indices = @transform_5, window_bounds = array<i64: 16, 128>}]} {
    %c0_i32 = arith.constant 0 : i32
    %0 = arith.cmpi eq, %arg1, %c0_i32 : i32
    %1 = arith.extui %0 : i1 to i32
    %c0_i32_0 = arith.constant 0 : i32
    %2 = arith.cmpi ne, %1, %c0_i32_0 : i32
    scf.if %2 {
      %c0_16 = arith.constant 0 : index
      %c0_17 = arith.constant 0 : index
      %20 = vector.load %arg6[%c0_16, %c0_17] : memref<1x128xf32, #tpu.memory_space<vmem>>, vector<1x128xf32>
      %21 = vector.shape_cast %20 : vector<1x128xf32> to vector<1x128xf32>
      %22 = vector.broadcast %21 : vector<1x128xf32> to vector<16x128xf32>
      %c0_18 = arith.constant 0 : index
      %c0_19 = arith.constant 0 : index
      %23 = vector.load %arg8[%c0_18, %c0_19] : memref<16x128xf32, #tpu.memory_space<vmem>>, vector<16x128xf32>
      tpu.vector_store %arg8[%c0_18, %c0_19], %22 {strides = array<i32>} : memref<16x128xf32, #tpu.memory_space<vmem>>, vector<16x128xf32>,
    } else {
    }
    %c0 = arith.constant 0 : index
    %c0_1 = arith.constant 0 : index
    %3 = vector.load %arg2[%c0, %c0_1] : memref<16x128xbf16, #tpu.memory_space<vmem>>, vector<16x128xbf16>
    %c0_2 = arith.constant 0 : index
    %c0_3 = arith.constant 0 : index
    %4 = vector.load %arg3[%c0_2, %c0_3] : memref<128x128xbf16, #tpu.memory_space<vmem>>, vector<128x128xbf16>
    %cst = arith.constant dense<0.000000e+00> : vector<16x128xf32>
    %5 = tpu.matmul %3, %4, %cst {dimension_numbers = #tpu.dot_dimension_numbers<[1], [0], [0], [1], [0, 0, 1, 1], [], []>} : vector<16x128xbf16>, vector<128x128xbf16>, vector<16x128xf32> -> vector<16x128xf32>
    %c0_4 = arith.constant 0 : index
    %c0_5 = arith.constant 0 : index
    %6 = vector.load %arg4[%c0_4, %c0_5] : memref<1x128xf32, #tpu.memory_space<vmem>>, vector<1x128xf32>
    %7 = vector.broadcast %6 : vector<1x128xf32> to vector<16x128xf32>
    %8 = arith.addf %5, %7 : vector<16x128xf32>
    %cst_6 = arith.constant 0.000000e+00 : f32
    %9 = vector.broadcast %cst_6 : f32 to vector<16x128xf32>
    %10 = arith.maximumf %8, %9 : vector<16x128xf32>
    %c0_7 = arith.constant 0 : index
    %c0_8 = arith.constant 0 : index
    %11 = vector.load %arg8[%c0_7, %c0_8] : memref<16x128xf32, #tpu.memory_space<vmem>>, vector<16x128xf32>
    %12 = arith.truncf %10 : vector<16x128xf32> to vector<16x128xbf16>
    %c0_9 = arith.constant 0 : index
    %c0_10 = arith.constant 0 : index
    %13 = vector.load %arg5[%c0_9, %c0_10] : memref<128x128xbf16, #tpu.memory_space<vmem>>, vector<128x128xbf16>
    %cst_11 = arith.constant dense<0.000000e+00> : vector<16x128xf32>
    %14 = tpu.matmul %12, %13, %cst_11 {dimension_numbers = #tpu.dot_dimension_numbers<[1], [0], [0], [1], [0, 0, 1, 1], [], []>} : vector<16x128xbf16>, vector<128x128xbf16>, vector<16x128xf32> -> vector<16x128xf32>
    %15 = arith.addf %11, %14 : vector<16x128xf32>
    %c0_12 = arith.constant 0 : index
    %c0_13 = arith.constant 0 : index
    %16 = vector.load %arg8[%c0_12, %c0_13] : memref<16x128xf32, #tpu.memory_space<vmem>>, vector<16x128xf32>
    tpu.vector_store %arg8[%c0_12, %c0_13], %15 {strides = array<i32>} : memref<16x128xf32, #tpu.memory_space<vmem>>, vector<16x128xf32>,
    %c0_i32_14 = arith.constant 0 : i32
    %17 = arith.cmpi eq, %arg1, %c0_i32_14 : i32
    %18 = arith.extui %17 : i1 to i32
    %c0_i32_15 = arith.constant 0 : i32
    %19 = arith.cmpi ne, %18, %c0_i32_15 : i32
    scf.if %19 {
      %c0_16 = arith.constant 0 : index
      %c0_17 = arith.constant 0 : index
      %20 = vector.load %arg8[%c0_16, %c0_17] : memref<16x128xf32, #tpu.memory_space<vmem>>, vector<16x128xf32>
      %c0_18 = arith.constant 0 : index
      %c0_19 = arith.constant 0 : index
      %21 = vector.load %arg7[%c0_18, %c0_19] : memref<16x128xf32, #tpu.memory_space<vmem>>, vector<16x128xf32>
      tpu.vector_store %arg7[%c0_18, %c0_19], %20 {strides = array<i32>} : memref<16x128xf32, #tpu.memory_space<vmem>>, vector<16x128xf32>,
    } else {
    }
    return
  }
  func.func @transform_0(%arg0: i32, %arg1: i32) -> (i32, i32) {
    %c0_i32 = arith.constant 0 : i32
    %c0_i32_0 = arith.constant 0 : i32
    return %arg0, %c0_i32 : i32, i32
  }
  func.func @transform_1(%arg0: i32, %arg1: i32) -> (i32, i32) {
    %c0_i32 = arith.constant 0 : i32
    %c0_i32_0 = arith.constant 0 : i32
    return %c0_i32, %arg1 : i32, i32
  }
  func.func @transform_2(%arg0: i32, %arg1: i32) -> (i32, i32) {
    %c0_i32 = arith.constant 0 : i32
    %c0_i32_0 = arith.constant 0 : i32
    return %c0_i32, %arg1 : i32, i32
  }
  func.func @transform_3(%arg0: i32, %arg1: i32) -> (i32, i32) {
    %c0_i32 = arith.constant 0 : i32
    %c0_i32_0 = arith.constant 0 : i32
    return %arg1, %c0_i32 : i32, i32
  }
  func.func @transform_4(%arg0: i32, %arg1: i32) -> (i32, i32) {
    %c0_i32 = arith.constant 0 : i32
    %c0_i32_0 = arith.constant 0 : i32
    %c0_i32_1 = arith.constant 0 : i32
    return %c0_i32, %c0_i32_0 : i32, i32
  }
  func.func @transform_5(%arg0: i32, %arg1: i32) -> (i32, i32) {
    %c0_i32 = arith.constant 0 : i32
    %c0_i32_0 = arith.constant 0 : i32
    return %arg0, %c0_i32 : i32, i32
  }
}

</mosaic_0001>

<llo_original>
// kernel: feed_forward_block.1
$region0: #{feed_forward_block.1}
  #allocation0 [shape = 'u32[]', space=smem, size = 0x4, offset = 0x4, fixed_abs, tag = 'smem constant byte address 0x4 - core index']
  #allocation1 [shape = 'u32[144,128]{1,0:T(1,128)}', space=vmem, size = 0x12000, scoped, tag = 'internal scratch']
  #allocation2 [shape = 'f32[16,128]{1,0:T(8,128)}', space=vmem, size = 0x2000, scoped, tag = 'scratch operand']
  %s0 = inlined_call_operand.vmem [shape: bf16[16,128], index: 0, kind: input, shape index: {}]
  %s1 = inlined_call_operand.vmem [shape: bf16[128,128], index: 1, kind: input, shape index: {}]
  %s2 = inlined_call_operand.vmem [shape: f32[1,128], index: 2, kind: input, shape index: {}]
  %s3 = inlined_call_operand.vmem [shape: bf16[128,128], index: 3, kind: input, shape index: {}]
  %s4 = inlined_call_operand.vmem [shape: f32[1,128], index: 4, kind: input, shape index: {}]
  %s5 = inlined_call_operand.vmem [shape: f32[16,128], index: 5, kind: output, shape index: {}]
  %s6 = sld [smem:[#allocation0]]
  $region38: #{feed_forward_block.1} parent=0
    _
  %s8 = ssub.s32 1, %s6
  %s9 = scalar_select 0, %s8, %s6
  // Predicated region
  $region2: #{feed_forward_block.1} parent=0 // pred_check
    _
  $region3: #{feed_forward_block.1} parent=0 // pred_check_branch
    %11 = sbr.rel (0) target = $region5
  $region4: #{feed_forward_block.1} parent=0 // pred_region
    _
  $region5: #{feed_forward_block.1} parent=0 // pred_fallthru
    _
  // Predicated region
  $region6: #{feed_forward_block.1} parent=0 // pred_check
    _
  $region7: #{feed_forward_block.1} parent=0 // pred_check_branch
    %13 = sbr.rel (0) target = $region9
  $region8: #{feed_forward_block.1} parent=0 // pred_region
    _
  $region9: #{feed_forward_block.1} parent=0 // pred_fallthru
    _
  // Predicated region
  $region10: #{feed_forward_block.1} parent=0 // pred_check
    _
  $region11: #{feed_forward_block.1} parent=0 // pred_check_branch
    %15 = sbr.rel (0) target = $region13
  $region12: #{feed_forward_block.1} parent=0 // pred_region
    _
  $region13: #{feed_forward_block.1} parent=0 // pred_fallthru
    _
  // Predicated region
  $region14: #{feed_forward_block.1} parent=0 // pred_check
    _
  $region15: #{feed_forward_block.1} parent=0 // pred_check_branch
    %17 = sbr.rel (0) target = $region17
  $region16: #{feed_forward_block.1} parent=0 // pred_region
    _
  $region17: #{feed_forward_block.1} parent=0 // pred_fallthru
    _
  // Predicated region
  $region18: #{feed_forward_block.1} parent=0 // pred_check
    _
  $region19: #{feed_forward_block.1} parent=0 // pred_check_branch
    %19 = sbr.rel (0) target = $region21
  $region20: #{feed_forward_block.1} parent=0 // pred_region
    _
  $region21: #{feed_forward_block.1} parent=0 // pred_fallthru
    _
  %p21 = scmp.eq.s32.totalorder 0, 0
  // Predicated region
  $region22: #{feed_forward_block.1} parent=0 // pred_check
    %p22 = pneg %p21
  $region23: #{feed_forward_block.1} parent=0 // pred_check_branch
    %24 = sbr.rel (%p22) target = $region25
  $region24: #{feed_forward_block.1} parent=0 // pred_region
    %v25 = vld [vmem:[%s4] sm:$0x1]
    %v27 = vlaneseq
    %v28 = vshrl.u32 %v27, 7
    %v29 = vsub.s32 0, %v28
    %v30 = vrot.slane %v25, %v29
    %32 = vst [vmem:[#allocation2] sm:$0xff] %v30
    %33 = vst [vmem:[#allocation2 + $0x8] sm:$0xff] %v30
  $region25: #{feed_forward_block.1} parent=0 // pred_fallthru
    _
  %v34 = vld [vmem:[%s0] sm:$0xf]
  %v35 = vld [vmem:[%s0 + $0x4] sm:$0xf]
  %v36 = vld [vmem:[%s1] sm:$0xf]
  %v37 = vld [vmem:[%s1 + $0x4] sm:$0xf]
  %v38 = vld [vmem:[%s1 + $0x8] sm:$0xf]
  %v39 = vld [vmem:[%s1 + $0xc] sm:$0xf]
  %v40 = vld [vmem:[%s1 + $0x10] sm:$0xf]
  %v41 = vld [vmem:[%s1 + $0x14] sm:$0xf]
  %v42 = vld [vmem:[%s1 + $0x18] sm:$0xf]
  %v43 = vld [vmem:[%s1 + $0x1c] sm:$0xf]
  %v44 = vld [vmem:[%s1 + $0x20] sm:$0xf]
  %v45 = vld [vmem:[%s1 + $0x24] sm:$0xf]
  %v46 = vld [vmem:[%s1 + $0x28] sm:$0xf]
  %v47 = vld [vmem:[%s1 + $0x2c] sm:$0xf]
  %v48 = vld [vmem:[%s1 + $0x30] sm:$0xf]
  %v49 = vld [vmem:[%s1 + $0x34] sm:$0xf]
  %v50 = vld [vmem:[%s1 + $0x38] sm:$0xf]
  %v51 = vld [vmem:[%s1 + $0x3c] sm:$0xf]
  %v52 = vld [vmem:[%s2] sm:$0x1]
  %v54 = vlaneseq
  %v55 = vshrl.u32 %v54, 7
  %v56 = vsub.s32 0, %v55
  %v57 = vrot.slane %v52, %v56
  %v61 = vunpack.c.l.b16 %v34
  %v62 = vunpack.c.l.b16 %v35
  %v63 = vpack.c.b16 %v62, %v61
  %v81 = vunpack.c.l.b16 %v36
  %v82 = vunpack.c.l.b16 %v37
  %v83 = vunpack.c.l.b16 %v38
  %v84 = vunpack.c.l.b16 %v39
  %v85 = vunpack.c.l.b16 %v40
  %v86 = vunpack.c.l.b16 %v41
  %v87 = vunpack.c.l.b16 %v42
  %v88 = vunpack.c.l.b16 %v43
  %v89 = vunpack.c.l.b16 %v44
  %v90 = vunpack.c.l.b16 %v45
  %v91 = vunpack.c.l.b16 %v46
  %v92 = vunpack.c.l.b16 %v47
  %v93 = vunpack.c.l.b16 %v48
  %v94 = vunpack.c.l.b16 %v49
  %v95 = vunpack.c.l.b16 %v50
  %v96 = vunpack.c.l.b16 %v51
  %v97 = vpack.c.b16 %v82, %v81
  %v98 = vpack.c.b16 %v84, %v83
  %v99 = vpack.c.b16 %v86, %v85
  %v100 = vpack.c.b16 %v88, %v87
  %v101 = vpack.c.b16 %v90, %v89
  %v102 = vpack.c.b16 %v92, %v91
  %v103 = vpack.c.b16 %v94, %v93
  %v104 = vpack.c.b16 %v96, %v95
  %113 = vmatprep.subr.bf16.mxu0 0
  %114 = vmatpush1.bf16.msra.mxu0 %v97
  %115 = vmatprep.subr.bf16.mxu0 0
  %116 = vmatpush1.bf16.msra.mxu0 %v98
  %117 = vmatprep.subr.bf16.mxu0 0
  %118 = vmatpush1.bf16.msra.mxu0 %v99
  %119 = vmatprep.subr.bf16.mxu0 0
  %120 = vmatpush1.bf16.msra.mxu0 %v100
  %121 = vmatprep.subr.bf16.mxu0 0
  %122 = vmatpush1.bf16.msra.mxu0 %v101
  %123 = vmatprep.subr.bf16.mxu0 0
  %124 = vmatpush1.bf16.msra.mxu0 %v102
  %125 = vmatprep.subr.bf16.mxu0 0
  %126 = vmatpush1.bf16.msra.mxu0 %v103
  %127 = vmatprep.subr.bf16.mxu0 0
  %128 = vmatpush1.bf16.msra.mxu0 %v104
  %129 = vmatprep.subr.bf16.mxu0 0
  %130 = vmatpush1.bf16.msra.mxu0 0
  %131 = vmatprep.subr.bf16.mxu0 0
  %132 = vmatpush1.bf16.msra.mxu0 0
  %133 = vmatprep.subr.bf16.mxu0 0
  %134 = vmatpush1.bf16.msra.mxu0 0
  %135 = vmatprep.subr.bf16.mxu0 0
  %136 = vmatpush1.bf16.msra.mxu0 0
  %137 = vmatprep.subr.bf16.mxu0 0
  %138 = vmatpush1.bf16.msra.mxu0 0
  %139 = vmatprep.subr.bf16.mxu0 0
  %140 = vmatpush1.bf16.msra.mxu0 0
  %141 = vmatprep.subr.bf16.mxu0 0
  %142 = vmatpush1.bf16.msra.mxu0 0
  %143 = vmatprep.subr.bf16.mxu0 0
  %144 = vmatpush1.bf16.msra.mxu0 0
  %145 = vmatprep.mubr.bf16.mxu0 0
  %146 = vmatmul.mubr.bf16.gmra.mrb[0].mxu0 %v63
  %v147 = vpop.f32.mrb[0].mxu0
  %v148 = vadd.f32 %v57, %v147
  %v149 = vpop.f32.mrb[0].mxu0
  %v150 = vpop.f32.mrb[0].mxu0
  %v151 = vadd.f32 %v57, %v150
  %v152 = vpop.f32.mrb[0].mxu0
  %153 = vdwg.mxu0
  %v154 = vmax.f32 %v148, 0.0
  %v155 = vmax.f32 %v151, 0.0
  %v156 = vld [vmem:[#allocation2] sm:$0xff]
  %v157 = vld [vmem:[#allocation2 + $0x8] sm:$0xff]
  %v158 = vpack.c.bf16 %v155, %v154
  %v159 = vld [vmem:[%s3] sm:$0xf]
  %v160 = vld [vmem:[%s3 + $0x4] sm:$0xf]
  %v161 = vld [vmem:[%s3 + $0x8] sm:$0xf]
  %v162 = vld [vmem:[%s3 + $0xc] sm:$0xf]
  %v163 = vld [vmem:[%s3 + $0x10] sm:$0xf]
  %v164 = vld [vmem:[%s3 + $0x14] sm:$0xf]
  %v165 = vld [vmem:[%s3 + $0x18] sm:$0xf]
  %v166 = vld [vmem:[%s3 + $0x1c] sm:$0xf]
  %v167 = vld [vmem:[%s3 + $0x20] sm:$0xf]
  %v168 = vld [vmem:[%s3 + $0x24] sm:$0xf]
  %v169 = vld [vmem:[%s3 + $0x28] sm:$0xf]
  %v170 = vld [vmem:[%s3 + $0x2c] sm:$0xf]
  %v171 = vld [vmem:[%s3 + $0x30] sm:$0xf]
  %v172 = vld [vmem:[%s3 + $0x34] sm:$0xf]
  %v173 = vld [vmem:[%s3 + $0x38] sm:$0xf]
  %v174 = vld [vmem:[%s3 + $0x3c] sm:$0xf]
  %v191 = vunpack.c.l.b16 %v159
  %v192 = vunpack.c.l.b16 %v160
  %v193 = vunpack.c.l.b16 %v161
  %v194 = vunpack.c.l.b16 %v162
  %v195 = vunpack.c.l.b16 %v163
  %v196 = vunpack.c.l.b16 %v164
  %v197 = vunpack.c.l.b16 %v165
  %v198 = vunpack.c.l.b16 %v166
  %v199 = vunpack.c.l.b16 %v167
  %v200 = vunpack.c.l.b16 %v168
  %v201 = vunpack.c.l.b16 %v169
  %v202 = vunpack.c.l.b16 %v170
  %v203 = vunpack.c.l.b16 %v171
  %v204 = vunpack.c.l.b16 %v172
  %v205 = vunpack.c.l.b16 %v173
  %v206 = vunpack.c.l.b16 %v174
  %v207 = vpack.c.b16 %v192, %v191
  %v208 = vpack.c.b16 %v194, %v193
  %v209 = vpack.c.b16 %v196, %v195
  %v210 = vpack.c.b16 %v198, %v197
  %v211 = vpack.c.b16 %v200, %v199
  %v212 = vpack.c.b16 %v202, %v201
  %v213 = vpack.c.b16 %v204, %v203
  %v214 = vpack.c.b16 %v206, %v205
  %223 = vmatprep.subr.bf16.mxu0 0
  %224 = vmatpush1.bf16.msra.mxu0 %v207
  %225 = vmatprep.subr.bf16.mxu0 0
  %226 = vmatpush1.bf16.msra.mxu0 %v208
  %227 = vmatprep.subr.bf16.mxu0 0
  %228 = vmatpush1.bf16.msra.mxu0 %v209
  %229 = vmatprep.subr.bf16.mxu0 0
  %230 = vmatpush1.bf16.msra.mxu0 %v210
  %231 = vmatprep.subr.bf16.mxu0 0
  %232 = vmatpush1.bf16.msra.mxu0 %v211
  %233 = vmatprep.subr.bf16.mxu0 0
  %234 = vmatpush1.bf16.msra.mxu0 %v212
  %235 = vmatprep.subr.bf16.mxu0 0
  %236 = vmatpush1.bf16.msra.mxu0 %v213
  %237 = vmatprep.subr.bf16.mxu0 0
  %238 = vmatpush1.bf16.msra.mxu0 %v214
  %239 = vmatprep.subr.bf16.mxu0 0
  %240 = vmatpush1.bf16.msra.mxu0 0
  %241 = vmatprep.subr.bf16.mxu0 0
  %242 = vmatpush1.bf16.msra.mxu0 0
  %243 = vmatprep.subr.bf16.mxu0 0
  %244 = vmatpush1.bf16.msra.mxu0 0
  %245 = vmatprep.subr.bf16.mxu0 0
  %246 = vmatpush1.bf16.msra.mxu0 0
  %247 = vmatprep.subr.bf16.mxu0 0
  %248 = vmatpush1.bf16.msra.mxu0 0
  %249 = vmatprep.subr.bf16.mxu0 0
  %250 = vmatpush1.bf16.msra.mxu0 0
  %251 = vmatprep.subr.bf16.mxu0 0
  %252 = vmatpush1.bf16.msra.mxu0 0
  %253 = vmatprep.subr.bf16.mxu0 0
  %254 = vmatpush1.bf16.msra.mxu0 0
  %255 = vmatprep.mubr.bf16.mxu0 0
  %256 = vmatmul.mubr.bf16.gmra.mrb[0].mxu0 %v158
  %v257 = vpop.f32.mrb[0].mxu0
  %v258 = vadd.f32 0.0, %v257
  %v259 = vpop.f32.mrb[0].mxu0
  %v260 = vpop.f32.mrb[0].mxu0
  %v261 = vadd.f32 0.0, %v260
  %v262 = vpop.f32.mrb[0].mxu0
  %263 = vdwg.mxu0
  %v264 = vadd.f32 %v156, %v258
  %v265 = vadd.f32 %v157, %v261
  %266 = vst [vmem:[#allocation2] sm:$0xff] %v264
  %267 = vst [vmem:[#allocation2 + $0x8] sm:$0xff] %v265
  // Predicated region
  $region26: #{feed_forward_block.1} parent=0 // pred_check
    %p268 = pneg %p21
  $region27: #{feed_forward_block.1} parent=0 // pred_check_branch
    %270 = sbr.rel (%p268) target = $region29
  $region28: #{feed_forward_block.1} parent=0 // pred_region
    %v271 = vld [vmem:[#allocation2] sm:$0xff]
    %v272 = vld [vmem:[#allocation2 + $0x8] sm:$0xff]
    %273 = vst [vmem:[%s5] sm:$0xff] %v271
    %274 = vst [vmem:[%s5 + $0x8] sm:$0xff] %v272
  $region29: #{feed_forward_block.1} parent=0 // pred_fallthru
    _
  // Predicated region
  $region30: #{feed_forward_block.1} parent=0 // pred_check
    _
  $region31: #{feed_forward_block.1} parent=0 // pred_check_branch
    %276 = sbr.rel (0) target = $region33
  $region32: #{feed_forward_block.1} parent=0 // pred_region
    _
  $region33: #{feed_forward_block.1} parent=0 // pred_fallthru
    _
  // Predicated region
  $region34: #{feed_forward_block.1} parent=0 // pred_check
    _
  $region35: #{feed_forward_block.1} parent=0 // pred_check_branch
    %278 = sbr.rel (0) target = $region37
  $region36: #{feed_forward_block.1} parent=0 // pred_region
    _
  $region37: #{feed_forward_block.1} parent=0 // pred_fallthru
    _

</llo_original>
